<compile_context>
chip_gen: v7x
topology: tpu7x:2x2x1
jax: 0.10.0
libtpu: 0.0.40
codegen_flags: <defaults>
</compile_context>

<pallas_src>
import functools
import math

import jax
import jax.numpy as jnp
from jax.experimental import pallas as pl
from jax.experimental.pallas import tpu as pltpu


def _linear_silu_kernel(x_ref, w_ref, b_ref, o_ref):
    # x_ref: (1, C_in, tn)  VMEM tile of spatial tokens (lane axis = tokens)
    # w_ref: (C_out, C_in)  full weight, torch layout (bf16, no transpose needed)
    # b_ref: (C_out, 1)     f32 bias column (broadcast over lanes)
    # o_ref: (1, C_out, tn) output tile (already NCHW-ordered)
    x = x_ref[0].astype(jnp.bfloat16)                                # (C_in, tn)
    y = jnp.dot(w_ref[...], x, preferred_element_type=jnp.float32)   # (C_out, tn) f32 acc
    y = y + b_ref[...]
    y = y * jax.nn.sigmoid(y)                                        # SiLU (EUP logistic)
    o_ref[0] = y.astype(o_ref.dtype)


def _round_up(x, m):
    return ((x + m - 1) // m) * m


@functools.partial(jax.jit, static_argnames=("tn",))
def linear_layer_forward(x_nchw, weight, bias, *, tn=512):
    """Forward pass equivalent to Linear_Layer.forward (eval mode).

    x_nchw : (B, C_in, H, W)
    weight : (C_out, C_in)   -- torch nn.Linear layout (NOT transposed)
    bias   : (C_out,)
    returns: (B, C_out, H, W), same dtype as x
    """
    b, c_in, h, w = x_nchw.shape
    c_out = weight.shape[0]
    n = h * w

    # Native-layout token matrix: (B, C_in, N). No NCHW<->NHWC permute passes.
    x3 = x_nchw.reshape(b, c_in, n)

    # Lane-dense tiling of the spatial axis; pad N up to a tile multiple only if needed
    # (padded tokens compute silu(bias) garbage that is sliced off below).
    tn_eff = min(tn, _round_up(n, 128))
    n_pad = _round_up(n, tn_eff)
    if n_pad != n:
        x3 = jnp.pad(x3, ((0, 0), (0, 0), (0, n_pad - n)))

    w_bf16 = weight.astype(jnp.bfloat16)                 # bf16 MXU operand
    b_col = bias.astype(jnp.float32).reshape(c_out, 1)   # f32 epilogue

    out3 = pl.pallas_call(
        _linear_silu_kernel,
        out_shape=jax.ShapeDtypeStruct((b, c_out, n_pad), x_nchw.dtype),
        grid_spec=pltpu.PrefetchScalarGridSpec(
            num_scalar_prefetch=0,
            grid=(b, n_pad // tn_eff),
            in_specs=[
                pl.BlockSpec((1, c_in, tn_eff), lambda bi, j: (bi, 0, j)),
                pl.BlockSpec((c_out, c_in), lambda bi, j: (0, 0)),
                pl.BlockSpec((c_out, 1), lambda bi, j: (0, 0)),
            ],
            out_specs=pl.BlockSpec((1, c_out, tn_eff), lambda bi, j: (bi, 0, j)),
        ),
        compiler_params=pltpu.CompilerParams(
            dimension_semantics=("parallel", "parallel")),
    )(x3, w_bf16, b_col)

    # (B, C_out, N_pad) is already NCHW-ordered; drop padding only if we added any.
    if n_pad != n:
        out3 = out3[:, :, :n]
    return out3.reshape(b, c_out, h, w)


def init_linear_params(key, n_channels, out_channels):
    """Deterministic init mimicking nn.Linear default (U(-1/sqrt(fan_in), 1/sqrt(fan_in)))."""
    kw, kb = jax.random.split(key)
    bound = 1.0 / math.sqrt(n_channels)
    weight = jax.random.uniform(
        kw, (out_channels, n_channels), jnp.float32, -bound, bound)
    bias = jax.random.uniform(
        kb, (out_channels,), jnp.float32, -bound, bound)
    return weight, bias


if __name__ == "__main__":
    key = jax.random.PRNGKey(0)
    k_x, k_p = jax.random.split(key)

    B, C_IN, H, W = 2, 4, 16, 16
    C_OUT = 8

    x = jax.random.normal(k_x, (B, C_IN, H, W), jnp.float32)
    weight, bias = init_linear_params(k_p, C_IN, C_OUT)

    out = jax.block_until_ready(linear_layer_forward(x, weight, bias))

    # Pure-JAX f32 reference (matches the PyTorch module in eval mode).
    tokens = jnp.transpose(x, (0, 2, 3, 1)).reshape(-1, C_IN)
    ref = tokens @ weight.T + bias
    ref = ref * jax.nn.sigmoid(ref)
    ref = jnp.transpose(ref.reshape(B, H, W, C_OUT), (0, 3, 1, 2))

    assert out.shape == (B, C_OUT, H, W)
    # bf16 matmul operands (f32 accumulation) -> relaxed tolerance vs f32 reference
    assert jnp.allclose(out, ref, atol=2e-2, rtol=2e-2), "mismatch vs reference"

    print("KERNEL_OK")
</pallas_src>

<mosaic_0001>
module attributes {stable_mosaic.version = 11 : i64} {
  func.func @_linear_silu_kernel(%arg0: i32, %arg1: i32, %arg2: memref<1x4x256xf32, #tpu.memory_space<vmem>>, %arg3: memref<8x4xbf16, #tpu.memory_space<vmem>>, %arg4: memref<8x1xf32, #tpu.memory_space<vmem>>, %arg5: memref<1x8x256xf32, #tpu.memory_space<vmem>>) attributes {dimension_semantics = [#tpu.dimension_semantics<parallel>, #tpu.dimension_semantics<parallel>], iteration_bounds = array<i64: 2, 1>, scalar_prefetch = 0 : i64, scratch_operands = 0 : i64, tpu.core_type = #tpu.core_type<tc>, window_params = [{transform_indices = @transform_0, window_bounds = array<i64: 1, 4, 256>}, {pipeline_mode = #tpu.pipeline_mode<synchronous>, transform_indices = @transform_1, window_bounds = array<i64: 8, 4>}, {pipeline_mode = #tpu.pipeline_mode<synchronous>, transform_indices = @transform_2, window_bounds = array<i64: 8, 1>}, {transform_indices = @transform_3, window_bounds = array<i64: 1, 8, 256>}]} {
    %c0 = arith.constant 0 : index
    %c0_0 = arith.constant 0 : index
    %c0_1 = arith.constant 0 : index
    %0 = vector.load %arg2[%c0, %c0_0, %c0_1] : memref<1x4x256xf32, #tpu.memory_space<vmem>>, vector<1x4x256xf32>
    %1 = vector.shape_cast %0 : vector<1x4x256xf32> to vector<4x256xf32>
    %2 = arith.truncf %1 : vector<4x256xf32> to vector<4x256xbf16>
    %c0_2 = arith.constant 0 : index
    %c0_3 = arith.constant 0 : index
    %3 = vector.load %arg3[%c0_2, %c0_3] : memref<8x4xbf16, #tpu.memory_space<vmem>>, vector<8x4xbf16>
    %cst = arith.constant dense<0.000000e+00> : vector<8x256xf32>
    %4 = tpu.matmul %3, %2, %cst {dimension_numbers = #tpu.dot_dimension_numbers<[1], [0], [0], [1], [0, 0, 1, 1], [], []>} : vector<8x4xbf16>, vector<4x256xbf16>, vector<8x256xf32> -> vector<8x256xf32>
    %c0_4 = arith.constant 0 : index
    %c0_5 = arith.constant 0 : index
    %5 = vector.load %arg4[%c0_4, %c0_5] : memref<8x1xf32, #tpu.memory_space<vmem>>, vector<8x1xf32>
    %6 = vector.broadcast %5 : vector<8x1xf32> to vector<8x256xf32>
    %7 = arith.addf %4, %6 : vector<8x256xf32>
    %8 = arith.negf %7 : vector<8x256xf32>
    %9 = math.exp %8 : vector<8x256xf32>
    %cst_6 = arith.constant 1.000000e+00 : f32
    %10 = vector.broadcast %cst_6 : f32 to vector<8x256xf32>
    %11 = arith.addf %10, %9 : vector<8x256xf32>
    %12 = arith.divf %10, %11 : vector<8x256xf32>
    %13 = arith.mulf %7, %12 : vector<8x256xf32>
    %c0_7 = arith.constant 0 : index
    %c0_8 = arith.constant 0 : index
    %c0_9 = arith.constant 0 : index
    %14 = vector.load %arg5[%c0_7, %c0_8, %c0_9] : memref<1x8x256xf32, #tpu.memory_space<vmem>>, vector<1x8x256xf32>
    %15 = vector.shape_cast %14 : vector<1x8x256xf32> to vector<8x256xf32>
    %16 = vector.shape_cast %13 : vector<8x256xf32> to vector<1x8x256xf32>
    tpu.vector_store %arg5[%c0_7, %c0_8, %c0_9], %16 {strides = array<i32>} : memref<1x8x256xf32, #tpu.memory_space<vmem>>, vector<1x8x256xf32>,
    return
  }
  func.func @transform_0(%arg0: i32, %arg1: i32) -> (i32, i32, i32) {
    %c0_i32 = arith.constant 0 : i32
    %c0_i32_0 = arith.constant 0 : i32
    return %arg0, %c0_i32, %arg1 : i32, i32, i32
  }
  func.func @transform_1(%arg0: i32, %arg1: i32) -> (i32, i32) {
    %c0_i32 = arith.constant 0 : i32
    %c0_i32_0 = arith.constant 0 : i32
    %c0_i32_1 = arith.constant 0 : i32
    return %c0_i32, %c0_i32_0 : i32, i32
  }
  func.func @transform_2(%arg0: i32, %arg1: i32) -> (i32, i32) {
    %c0_i32 = arith.constant 0 : i32
    %c0_i32_0 = arith.constant 0 : i32
    %c0_i32_1 = arith.constant 0 : i32
    return %c0_i32, %c0_i32_0 : i32, i32
  }
  func.func @transform_3(%arg0: i32, %arg1: i32) -> (i32, i32, i32) {
    %c0_i32 = arith.constant 0 : i32
    %c0_i32_0 = arith.constant 0 : i32
    return %arg0, %c0_i32, %arg1 : i32, i32, i32
  }
}

</mosaic_0001>

<llo_original>
// kernel: linear_layer_forward.1
$region0: #{linear_layer_forward.1}
  #allocation0 [shape = 'u32[]', space=smem, size = 0x4, offset = 0x4, fixed_abs, tag = 'smem constant byte address 0x4 - core index']
  #allocation1 [shape = 'u32[144,128]{1,0:T(1,128)}', space=vmem, size = 0x12000, scoped, tag = 'internal scratch']
  %s0 = inlined_call_operand.vmem [shape: f32[2,4,256], index: 0, kind: input, shape index: {}]
  %s1 = inlined_call_operand.vmem [shape: bf16[8,4], index: 1, kind: input, shape index: {}]
  %s2 = inlined_call_operand.vmem [shape: f32[8,1], index: 2, kind: input, shape index: {}]
  %s3 = inlined_call_operand.vmem [shape: f32[2,8,256], index: 3, kind: output, shape index: {}]
  %s4 = sld [smem:[#allocation0]]
  $region45: #{linear_layer_forward.1} parent=0
    _
  %s6 = ssub.s32 1, %s4
  %s7 = scalar_select 0, %s6, %s4
  loop: start=0, step=1, limit=4
  $region2: #{linear_layer_forward.1} parent=0 // loop_pre_header
    _
  $region3: #{linear_layer_forward.1} parent=0 // loop_header
    %s9 = sphi 0, %s13
    %p10 = scmp.ge.s32.totalorder %s9, 4
    %s16 = sphi 0, %s28
    %s17 = sphi 0, %s24
    %s18 = sphi 0, %s16
    %s19 = sphi 0, %s17
    %s20 = sphi 0, %s18
    %s21 = sphi 0, %s19
    %s33 = sphi 0, %s35
    %s36 = sphi 0, %s33
    %s37 = sphi 0, %s36
    %s53 = sphi 0, %s37
    %s57 = sphi 0, %s57
    %s59 = sphi 0, %s57
    %s60 = sphi 0, %s59
    %s74 = sphi 0, %s60
    %s78 = sphi 0, %s78
    %s80 = sphi 0, %s78
    %s81 = sphi 0, %s80
    %s95 = sphi 0, %s81
    %s103 = sphi 0, %s105
    %s106 = sphi 0, %s103
    %s107 = sphi 0, %s106
    %s123 = sphi 0, %s107
  $region4: #{linear_layer_forward.1} parent=0 // loop_header_branch
    %12 = sbr.rel (%p10) target = $region8
  $region5: #{linear_layer_forward.1} parent=0 // loop_body
    %s14 = ssub.s32 %s9, 1
    %s15 = ssub.s32 %s9, 2
    %s22 = sadd.s32 1, %s17
    %p23 = scmp.ge.s32.totalorder %s22, 1
    %s24 = scalar_select %p23, 0, %s22
    %s25 = sadd.s32 1, %s16
    %s26 = scalar_select %p23, %s25, %s16
    %p27 = scmp.ge.s32.totalorder %s26, 2
    %s28 = scalar_select %p27, 0, %s26
    %s29 = ssub.s32 %s16, %s28
    %s30 = ssub.s32 %s17, %s24
    %s31 = sor.u32 %s29, %s30
    %p32 = scmp.eq.s32.totalorder %s31, 0
    %s34 = sadd.s32 %s33, 1
    %s35 = scalar_select %p32, %s33, %s34
    %p38 = pneg %p32
    %p39 = scmp.eq.s32.totalorder %s9, 1
    %p40 = por %p38, %p39
    %p41 = scmp.ne.s32.totalorder %s33, %s36
    %p42 = scmp.eq.s32.totalorder %s9, 0
    %p43 = por %p41, %p42
    %p44 = scmp.ne.s32.totalorder %s33, %s36
    %p45 = scmp.eq.s32.totalorder %s14, 1
    %p46 = por %p44, %p45
    %p47 = scmp.ne.s32.totalorder %s36, %s37
    %p48 = scmp.eq.s32.totalorder %s14, 0
    %p49 = por %p47, %p48
    %p50 = scmp.ne.s32.totalorder %s36, %s37
    %p51 = scmp.eq.s32.totalorder %s15, 1
    %p52 = por %p50, %p51
    %p54 = scmp.ne.s32.totalorder %s37, %s53
    %p55 = scmp.eq.s32.totalorder %s15, 0
    %p56 = por %p54, %p55
    %s58 = sadd.s32 %s57, 1
    %p61 = scmp.eq.s32.totalorder %s9, 1
    %p62 = scmp.ne.s32.totalorder %s57, %s59
    %p63 = scmp.eq.s32.totalorder %s9, 0
    %p64 = por %p62, %p63
    %p65 = scmp.ne.s32.totalorder %s57, %s59
    %p66 = scmp.eq.s32.totalorder %s14, 1
    %p67 = por %p65, %p66
    %p68 = scmp.ne.s32.totalorder %s59, %s60
    %p69 = scmp.eq.s32.totalorder %s14, 0
    %p70 = por %p68, %p69
    %p71 = scmp.ne.s32.totalorder %s59, %s60
    %p72 = scmp.eq.s32.totalorder %s15, 1
    %p73 = por %p71, %p72
    %p75 = scmp.ne.s32.totalorder %s60, %s74
    %p76 = scmp.eq.s32.totalorder %s15, 0
    %p77 = por %p75, %p76
    %s79 = sadd.s32 %s78, 1
    %p82 = scmp.eq.s32.totalorder %s9, 1
    %p83 = scmp.ne.s32.totalorder %s78, %s80
    %p84 = scmp.eq.s32.totalorder %s9, 0
    %p85 = por %p83, %p84
    %p86 = scmp.ne.s32.totalorder %s78, %s80
    %p87 = scmp.eq.s32.totalorder %s14, 1
    %p88 = por %p86, %p87
    %p89 = scmp.ne.s32.totalorder %s80, %s81
    %p90 = scmp.eq.s32.totalorder %s14, 0
    %p91 = por %p89, %p90
    %p92 = scmp.ne.s32.totalorder %s80, %s81
    %p93 = scmp.eq.s32.totalorder %s15, 1
    %p94 = por %p92, %p93
    %p96 = scmp.ne.s32.totalorder %s81, %s95
    %p97 = scmp.eq.s32.totalorder %s15, 0
    %p98 = por %p96, %p97
    %s99 = ssub.s32 %s16, %s28
    %s100 = ssub.s32 %s17, %s24
    %s101 = sor.u32 %s99, %s100
    %p102 = scmp.eq.s32.totalorder %s101, 0
    %s104 = sadd.s32 %s103, 1
    %s105 = scalar_select %p102, %s103, %s104
    %p108 = pneg %p102
    %p109 = scmp.eq.s32.totalorder %s9, 1
    %p110 = por %p108, %p109
    %p111 = scmp.ne.s32.totalorder %s103, %s106
    %p112 = scmp.eq.s32.totalorder %s9, 0
    %p113 = por %p111, %p112
    %p114 = scmp.ne.s32.totalorder %s103, %s106
    %p115 = scmp.eq.s32.totalorder %s14, 1
    %p116 = por %p114, %p115
    %p117 = scmp.ne.s32.totalorder %s106, %s107
    %p118 = scmp.eq.s32.totalorder %s14, 0
    %p119 = por %p117, %p118
    %p120 = scmp.ne.s32.totalorder %s106, %s107
    %p121 = scmp.eq.s32.totalorder %s15, 1
    %p122 = por %p120, %p121
    %p124 = scmp.ne.s32.totalorder %s107, %s123
    %p125 = scmp.eq.s32.totalorder %s15, 0
    %p126 = por %p124, %p125
    %p127 = scmp.le.s32.totalorder 1, %s9
    %p128 = scmp.lt.s32.totalorder %s9, 3
    %p129 = pnand %p127, %p128
    %p130 = pneg %p129
    // Predicated region
    $region9: #{linear_layer_forward.1} parent=5 // pred_check
      _
    $region10: #{linear_layer_forward.1} parent=5 // pred_check_branch
      %132 = sbr.rel (%p129) target = $region12
    $region11: #{linear_layer_forward.1} parent=5 // pred_region
      %s133 = ssub.s32 %s9, 1
      // Predicated region
      $region13: #{linear_layer_forward.1} parent=11 // pred_check
        %p134 = pneg %p70
      $region14: #{linear_layer_forward.1} parent=11 // pred_check_branch
        %136 = sbr.rel (%p134) target = $region16
      $region15: #{linear_layer_forward.1} parent=11 // pred_region
        _
      $region16: #{linear_layer_forward.1} parent=11 // pred_fallthru
        _
      // Predicated region
      $region17: #{linear_layer_forward.1} parent=11 // pred_check
        %p137 = pneg %p91
      $region18: #{linear_layer_forward.1} parent=11 // pred_check_branch
        %139 = sbr.rel (%p137) target = $region20
      $region19: #{linear_layer_forward.1} parent=11 // pred_region
        _
      $region20: #{linear_layer_forward.1} parent=11 // pred_fallthru
        _
    $region12: #{linear_layer_forward.1} parent=5 // pred_fallthru
      _
    %p140 = scmp.lt.s32.totalorder %s9, 2
    // Predicated region
    $region21: #{linear_layer_forward.1} parent=5 // pred_check
      %p141 = pneg %p140
    $region22: #{linear_layer_forward.1} parent=5 // pred_check_branch
      %143 = sbr.rel (%p141) target = $region24
    $region23: #{linear_layer_forward.1} parent=5 // pred_region
      // Predicated region
      $region25: #{linear_layer_forward.1} parent=23 // pred_check
        %p144 = pneg %p43
      $region26: #{linear_layer_forward.1} parent=23 // pred_check_branch
        %146 = sbr.rel (%p144) target = $region28
      $region27: #{linear_layer_forward.1} parent=23 // pred_region
        %s147 = smul.u32 2, %s17
        %p148 = scmp.lt.s32.totalorder %s16, 1
        %s149 = scalar_select %p148, %s16, 1
        %p150 = scmp.lt.s32.totalorder %s147, 1
        %s151 = scalar_select %p150, %s147, 1
        %s152 = smul.addr %s149, 2
        %s153 = sadd.s32 %s151, %s152
        %s154 = smul.addr %s153, 4
        %s155 = scalar_lea.vmem %s0, %s154
        %s156 = smul.u32 2, %s17
      $region28: #{linear_layer_forward.1} parent=23 // pred_fallthru
        _
    $region24: #{linear_layer_forward.1} parent=5 // pred_fallthru
      _
    %p157 = scmp.le.s32.totalorder 1, %s9
    %p158 = scmp.lt.s32.totalorder %s9, 3
    %p159 = pnand %p157, %p158
    %p160 = pneg %p159
    // Predicated region
    $region29: #{linear_layer_forward.1} parent=5 // pred_check
      _
    $region30: #{linear_layer_forward.1} parent=5 // pred_check_branch
      %162 = sbr.rel (%p159) target = $region32
    $region31: #{linear_layer_forward.1} parent=5 // pred_region
      %s163 = ssub.s32 %s9, 1
      %s164 = smul.u32 2, %s19
      %p165 = scmp.lt.s32.totalorder %s18, 1
      %s166 = scalar_select %p165, %s18, 1
      %p167 = scmp.lt.s32.totalorder %s164, 1
      %s168 = scalar_select %p167, %s164, 1
      %s169 = smul.addr %s166, 2
      %s170 = sadd.s32 %s168, %s169
      %s171 = smul.addr %s170, 4
      %s172 = scalar_lea.vmem %s0, %s171
      %p173 = pneg %p49
      %p174 = pneg %p46
      %p175 = pneg %p70
      %p176 = pneg %p67
      %p177 = pneg %p91
      %p178 = pneg %p88
      %p179 = pneg %p119
      %p180 = pneg %p116
      %s181 = smul.u32 2, %s19
      %p182 = scmp.lt.s32.totalorder %s18, 1
      %s183 = scalar_select %p182, %s18, 1
      %p184 = scmp.lt.s32.totalorder %s181, 1
      %s185 = scalar_select %p184, %s181, 1
      %s186 = smul.addr %s183, 2
      %s187 = sadd.s32 %s185, %s186
      %s188 = smul.addr %s187, 8
      %s189 = scalar_lea.vmem %s3, %s188
      %s190 = smul.u32 2, %s19
      %p191 = scmp.lt.s32.totalorder %s18, 1
      %s192 = scalar_select %p191, %s18, 1
      %p193 = scmp.lt.s32.totalorder %s190, 1
      %s194 = scalar_select %p193, %s190, 1
      %s195 = smul.addr %s192, 2
      %s196 = sadd.s32 %s194, %s195
      %s197 = smul.addr %s196, 4
      %s198 = scalar_lea.vmem %s0, %s197
      %s199 = smul.u32 2, %s19
      %s200 = smul.u32 2, %s19
      %p201 = scmp.lt.s32.totalorder %s18, 1
      %s202 = scalar_select %p201, %s18, 1
      %p203 = scmp.lt.s32.totalorder %s200, 1
      %s204 = scalar_select %p203, %s200, 1
      %s205 = smul.addr %s202, 2
      %s206 = sadd.s32 %s204, %s205
      %s207 = smul.addr %s206, 8
      %s208 = scalar_lea.vmem %s3, %s207
      %s209 = smul.u32 2, %s19
      %v211 = vld [vmem:[%s198] sm:$0xff]
      %v213 = vcombine.high %v211, %v211
      %v215 = vpack.c.bf16 %v211, %v211
      %v216 = vpack.c.bf16 %v213, %v213
      %v217 = vld [vmem:[%s1] sm:$0xf]
      %v218 = vld [vmem:[%s2] sm:$0xff]
      %220 = vset.pattern.permute.xlu0 0
      %221 = vperm.xlu0 %220, %v218
      %v222 = vpop.permute.xlu0 %221
      %vm224 = vcmask 31744
      %v226 = vsel %vm224, %v217, 0
      %vm228 = vcmask 1041408
      %v230 = vsel %vm228, %v215, 0
      %v233 = vsel %vm228, %v216, 0
      %235 = vmatprep.subr.bf16.mxu0 %v233
      %236 = vmatpush1.bf16.msra.mxu0 %v230
      %237 = vmatprep.subr.bf16.mxu0 0
      %238 = vmatpush1.bf16.msra.mxu0 0
      %239 = vmatprep.subr.bf16.mxu0 0
      %240 = vmatpush1.bf16.msra.mxu0 0
      %241 = vmatprep.subr.bf16.mxu0 0
      %242 = vmatpush1.bf16.msra.mxu0 0
      %243 = vmatprep.subr.bf16.mxu0 0
      %244 = vmatpush1.bf16.msra.mxu0 0
      %245 = vmatprep.subr.bf16.mxu0 0
      %246 = vmatpush1.bf16.msra.mxu0 0
      %247 = vmatprep.subr.bf16.mxu0 0
      %248 = vmatpush1.bf16.msra.mxu0 0
      %249 = vmatprep.subr.bf16.mxu0 0
      %250 = vmatpush1.bf16.msra.mxu0 0
      %251 = vmatprep.subr.bf16.mxu0 0
      %252 = vmatpush1.bf16.msra.mxu0 0
      %253 = vmatprep.subr.bf16.mxu0 0
      %254 = vmatpush1.bf16.msra.mxu0 0
      %255 = vmatprep.subr.bf16.mxu0 0
      %256 = vmatpush1.bf16.msra.mxu0 0
      %257 = vmatprep.subr.bf16.mxu0 0
      %258 = vmatpush1.bf16.msra.mxu0 0
      %259 = vmatprep.subr.bf16.mxu0 0
      %260 = vmatpush1.bf16.msra.mxu0 0
      %261 = vmatprep.subr.bf16.mxu0 0
      %262 = vmatpush1.bf16.msra.mxu0 0
      %263 = vmatprep.subr.bf16.mxu0 0
      %264 = vmatpush1.bf16.msra.mxu0 0
      %265 = vmatprep.subr.bf16.mxu0 0
      %266 = vmatpush1.bf16.msra.mxu0 0
      %267 = vmatprep.mubr.bf16.mxu0 0
      %268 = vmatmul.mubr.bf16.gmra.mrb[0].mxu0 %v226
      %v269 = vpop.f32.mrb[0].mxu0
      %v270 = vadd.f32 %v222, %v269
      %v271 = vpop.f32.mrb[0].mxu0
      %v272 = vadd.f32 %v222, %v271
      %v273 = vpop.f32.mrb[0].mxu0
      %v274 = vpop.f32.mrb[0].mxu0
      %275 = vdwg.mxu0
      %v276 = vxor.u32 %v270, 2147483648
      %v277 = vxor.u32 %v272, 2147483648
      %v278 = vmul.f32 %v276, 1.442695
      %v279 = vpow.pop %v278
      %v280 = vmul.f32 %v277, 1.442695
      %v281 = vpow.pop %v280
      %v282 = vadd.f32 %v279, 1.0
      %v283 = vadd.f32 %v281, 1.0
      %v284 = vrcp.pop %v282
      %v285 = vmul.f32 1.0, %v284
      %v286 = vrcp.pop %v283
      %v287 = vmul.f32 1.0, %v286
      %v288 = vmul.f32 %v270, %v285
      %v289 = vmul.f32 %v272, %v287
      %290 = vst [vmem:[%s208] sm:$0xff] %v288
      %291 = vst [vmem:[%s208 + $0x8] sm:$0xff] %v289
      %s292 = smul.u32 2, %s19
      %p293 = scmp.lt.s32.totalorder %s18, 1
      %s294 = scalar_select %p293, %s18, 1
      %p295 = scmp.lt.s32.totalorder %s292, 1
      %s296 = scalar_select %p295, %s292, 1
      %s297 = smul.addr %s294, 2
      %s298 = sadd.s32 %s296, %s297
      %s299 = smul.addr %s298, 8
      %s300 = scalar_lea.vmem %s3, %s299
      // Predicated region
      $region33: #{linear_layer_forward.1} parent=31 // pred_check
        %p301 = pneg %p116
      $region34: #{linear_layer_forward.1} parent=31 // pred_check_branch
        %303 = sbr.rel (%p301) target = $region36
      $region35: #{linear_layer_forward.1} parent=31 // pred_region
        %s304 = smul.u32 2, %s19
      $region36: #{linear_layer_forward.1} parent=31 // pred_fallthru
        _
    $region32: #{linear_layer_forward.1} parent=5 // pred_fallthru
      _
    %p305 = scmp.le.s32.totalorder 2, %s9
    // Predicated region
    $region37: #{linear_layer_forward.1} parent=5 // pred_check
      %p306 = pneg %p305
    $region38: #{linear_layer_forward.1} parent=5 // pred_check_branch
      %308 = sbr.rel (%p306) target = $region40
    $region39: #{linear_layer_forward.1} parent=5 // pred_region
      %s309 = ssub.s32 %s9, 2
      // Predicated region
      $region41: #{linear_layer_forward.1} parent=39 // pred_check
        %p310 = pneg %p122
      $region42: #{linear_layer_forward.1} parent=39 // pred_check_branch
        %312 = sbr.rel (%p310) target = $region44
      $region43: #{linear_layer_forward.1} parent=39 // pred_region
        %s313 = smul.u32 2, %s21
        %p314 = scmp.lt.s32.totalorder %s20, 1
        %s315 = scalar_select %p314, %s20, 1
        %p316 = scmp.lt.s32.totalorder %s313, 1
        %s317 = scalar_select %p316, %s313, 1
        %s318 = smul.addr %s315, 2
        %s319 = sadd.s32 %s317, %s318
        %s320 = smul.addr %s319, 8
        %s321 = scalar_lea.vmem %s3, %s320
      $region44: #{linear_layer_forward.1} parent=39 // pred_fallthru
        _
    $region40: #{linear_layer_forward.1} parent=5 // pred_fallthru
      _
  $region6: #{linear_layer_forward.1} parent=0 // loop_footer
    %s13 = sadd.s32 1, %s9
  $region7: #{linear_layer_forward.1} parent=0 // loop_footer_branch
    %8 = sbr.rel target = $region3
  $region8: #{linear_layer_forward.1} parent=0 // loop_exit
    _

</llo_original>
